<compile_context>
chip_gen: v7x
topology: tpu7x:2x2x1
jax: 0.10.0
libtpu: 0.0.40
codegen_flags: <defaults>
</compile_context>

<pallas_src>
import functools
import math

import jax
import jax.numpy as jnp
import numpy as np
from jax.experimental import pallas as pl
from jax.experimental.pallas import tpu as pltpu


# ---------------------------------------------------------------------------
# Kernels (x tile: (Bb, tt, D); pe tile: (tt, D) broadcast over the batch block)
# ---------------------------------------------------------------------------
def _posemb_eval_kernel(x_ref, pe_ref, o_ref):
    o_ref[...] = (x_ref[...] + pe_ref[...]).astype(o_ref.dtype)


def _posemb_train_hw_kernel(seed_ref, x_ref, pe_ref, o_ref, *, threshold, scale):
    # Train path on real TPU: hardware PRNG, per-tile independent stream,
    # integer-threshold compare (keep prob = 1 - rate).
    y = x_ref[...] + pe_ref[...]
    t = pl.program_id(0)
    b = pl.program_id(1)
    pltpu.prng_seed(seed_ref[0] + t * pl.num_programs(1) + b)
    bits = pltpu.bitcast(pltpu.prng_random_bits(y.shape), jnp.uint32)
    keep = bits >= jnp.uint32(threshold)
    o_ref[...] = jnp.where(keep, y * scale, 0.0).astype(o_ref.dtype)


def _posemb_train_bits_kernel(x_ref, pe_ref, bits_ref, o_ref, *, threshold, scale):
    # Portable train path (CPU / interpret backends): random bits streamed as input.
    y = x_ref[...] + pe_ref[...]
    keep = bits_ref[...] >= jnp.uint32(threshold)
    o_ref[...] = jnp.where(keep, y * scale, 0.0).astype(o_ref.dtype)


# ---------------------------------------------------------------------------
# Tile selection: biggest x/out block under a fixed VMEM budget.
# ---------------------------------------------------------------------------
def _choose_tiles(B, T, D, itemsize, x_block_budget=4 << 20):
    """Pick (Bb, tt) so the x/out block stays under the budget.

    tt is either a multiple of 8 or equal to the full T (both satisfy the
    (8, 128) BlockSpec constraint); ragged edges are handled by pl.cdiv grids.
    """
    Bb = min(B, 8)
    tt = T if T <= 1024 else 1024
    while Bb * tt * D * itemsize > x_block_budget and tt > 8:
        tt = max(8, (tt // 2) // 8 * 8)
    while Bb * tt * D * itemsize > x_block_budget and Bb > 1:
        Bb = max(1, Bb // 2)
    return Bb, tt


# ---------------------------------------------------------------------------
# Wrapper
# ---------------------------------------------------------------------------
def position_embedding(x, pe, *, dropout_rate=0.1, train=False, seed=0):
    """out = dropout(x + pe[:T]).   x: (B, T, D), pe: (max_len, D).

    NOTE: the dropout mask is a deterministic function of `seed` (and grid
    position); callers must vary `seed` across training steps.
    """
    B, T, D = x.shape
    assert pe.shape[0] >= T and pe.shape[1] == D, (pe.shape, x.shape)

    x_dtype = x.dtype
    pe_t = pe[:T].astype(x_dtype)               # constant table, one full read total
    itemsize = jnp.dtype(x_dtype).itemsize

    # TODO(synk): if D is not a multiple of 128, fold/pad the lane dim in the
    # wrapper for unmasked stores (no-op for the lane-dense D=128 default here).
    Bb, tt = _choose_tiles(B, T, D, itemsize)
    nt, nb = pl.cdiv(T, tt), pl.cdiv(B, Bb)
    # Time-tile axis OUTER, batch axis INNER: pe's block index is constant over
    # the inner loop, so Pallas skips the pe re-fetch (B-fold traffic reduction).
    grid = (nt, nb)

    x_spec = pl.BlockSpec((Bb, tt, D), lambda t, b: (b, t, 0))
    pe_spec = pl.BlockSpec((tt, D), lambda t, b: (t, 0))
    out_spec = pl.BlockSpec((Bb, tt, D), lambda t, b: (b, t, 0))

    rate = float(dropout_rate)
    use_dropout = bool(train) and rate > 0.0
    scale = 1.0 / (1.0 - rate) if use_dropout else 1.0
    threshold = min(int(round(rate * (1 << 32))), (1 << 32) - 1)

    on_tpu = jax.default_backend() == "tpu"
    use_bits_fallback = use_dropout and not on_tpu

    # Explicit VMEM budget: double-buffered x/out (+bits) tiles + pe tile + slack.
    x_block_bytes = Bb * tt * D * itemsize
    pe_block_bytes = tt * D * itemsize
    bits_block_bytes = Bb * tt * D * 4 if use_bits_fallback else 0
    needed = 2 * (2 * x_block_bytes + pe_block_bytes + bits_block_bytes)
    vmem_limit = int(min(max(needed + (4 << 20), 32 << 20), 56 << 20))

    cparams = pltpu.CompilerParams(
        dimension_semantics=("parallel", "parallel"),
        vmem_limit_bytes=vmem_limit,
    )
    out_shape = jax.ShapeDtypeStruct((B, T, D), x_dtype)

    if not use_dropout:
        # Eval mode (or rate == 0): dropout is the identity.
        return pl.pallas_call(
            _posemb_eval_kernel,
            out_shape=out_shape,
            grid=grid,
            in_specs=[x_spec, pe_spec],
            out_specs=out_spec,
            compiler_params=cparams,
        )(x, pe_t)

    if on_tpu:
        kernel = functools.partial(
            _posemb_train_hw_kernel, threshold=threshold, scale=scale)
        seed_arr = jnp.asarray([int(seed)], jnp.int32)     # scalar-prefetched to SMEM
        return pl.pallas_call(
            kernel,
            out_shape=out_shape,
            grid_spec=pltpu.PrefetchScalarGridSpec(
                num_scalar_prefetch=1,
                grid=grid,
                in_specs=[
                    pl.BlockSpec((Bb, tt, D), lambda t, b, seed: (b, t, 0)),
                    pl.BlockSpec((tt, D), lambda t, b, seed: (t, 0)),
                ],
                out_specs=pl.BlockSpec((Bb, tt, D), lambda t, b, seed: (b, t, 0)),
            ),
            compiler_params=cparams,
        )(seed_arr, x, pe_t)

    # Portable fallback (CPU / interpret): precomputed uint32 bits as an extra stream.
    bits = jax.random.bits(jax.random.PRNGKey(int(seed)), (B, T, D), dtype=jnp.uint32)
    kernel = functools.partial(
        _posemb_train_bits_kernel, threshold=threshold, scale=scale)
    bits_spec = pl.BlockSpec((Bb, tt, D), lambda t, b: (b, t, 0))
    return pl.pallas_call(
        kernel,
        out_shape=out_shape,
        grid=grid,
        in_specs=[x_spec, pe_spec, bits_spec],
        out_specs=out_spec,
        compiler_params=cparams,
    )(x, pe_t, bits)


# ---------------------------------------------------------------------------
# Constant pe buffer (identical math to the PyTorch __init__)
# ---------------------------------------------------------------------------
def make_positional_encoding(max_len, d_model, dtype=jnp.float32):
    assert d_model % 2 == 0, "d_model must be even (same constraint as the torch snippet)"
    position = jnp.arange(max_len, dtype=jnp.float32)[:, None]                 # (max_len, 1)
    div_term = jnp.exp(jnp.arange(0, d_model, 2, dtype=jnp.float32)
                       * (-math.log(10000.0) / d_model))                       # (d_model/2,)
    angles = position * div_term                                               # (max_len, d_model/2)
    pe = jnp.zeros((max_len, d_model), jnp.float32)
    pe = pe.at[:, 0::2].set(jnp.sin(angles))
    pe = pe.at[:, 1::2].set(jnp.cos(angles))
    return pe.astype(dtype)


# Pure-JAX reference (eval mode: dropout is identity)
def reference_forward(x, pe):
    return x + pe[None, : x.shape[1], :]


if __name__ == "__main__":
    d_model, max_len = 128, 5000
    B, T = 2, 8
    p_drop = 0.1

    key = jax.random.PRNGKey(0)
    x = jax.random.normal(key, (B, T, d_model), jnp.float32)
    pe = make_positional_encoding(max_len, d_model)

    # --- eval mode (dropout identity), must match the PyTorch forward exactly ---
    out_eval = jax.block_until_ready(
        position_embedding(x, pe, dropout_rate=p_drop, train=False))
    ref = jax.block_until_ready(reference_forward(x, pe))
    assert out_eval.shape == (B, T, d_model), out_eval.shape
    np.testing.assert_allclose(np.asarray(out_eval), np.asarray(ref), atol=1e-5, rtol=1e-5)

    # --- train mode: inverted dropout ---
    # TODO(synk): torch.nn.Dropout's exact RNG stream is not reproducible; we verify
    # the dropout *semantics* instead (every element is either 0 or (x+pe)/(1-p)).
    out_train = jax.block_until_ready(
        position_embedding(x, pe, dropout_rate=p_drop, train=True, seed=1234))
    y = np.asarray(out_train)
    expect = np.asarray(ref) / (1.0 - p_drop)
    is_zero = np.abs(y) <= 1e-6
    is_kept = np.abs(y - expect) <= 1e-4 * (1.0 + np.abs(expect))
    assert np.all(is_zero | is_kept), "train-mode dropout produced invalid values"

    print("KERNEL_OK")
</pallas_src>

<mosaic_0001>
module attributes {stable_mosaic.version = 11 : i64} {
  func.func @_posemb_eval_kernel(%arg0: i32, %arg1: i32, %arg2: memref<2x8x128xf32, #tpu.memory_space<vmem>>, %arg3: memref<8x128xf32, #tpu.memory_space<vmem>>, %arg4: memref<2x8x128xf32, #tpu.memory_space<vmem>>) attributes {dimension_semantics = [#tpu.dimension_semantics<parallel>, #tpu.dimension_semantics<parallel>], iteration_bounds = array<i64: 1, 1>, scalar_prefetch = 0 : i64, scratch_operands = 0 : i64, tpu.core_type = #tpu.core_type<tc>, window_params = [{transform_indices = @transform_0, window_bounds = array<i64: 2, 8, 128>}, {transform_indices = @transform_1, window_bounds = array<i64: 8, 128>}, {transform_indices = @transform_2, window_bounds = array<i64: 2, 8, 128>}]} {
    %c0 = arith.constant 0 : index
    %c0_0 = arith.constant 0 : index
    %c0_1 = arith.constant 0 : index
    %0 = vector.load %arg2[%c0, %c0_0, %c0_1] : memref<2x8x128xf32, #tpu.memory_space<vmem>>, vector<2x8x128xf32>
    %c0_2 = arith.constant 0 : index
    %c0_3 = arith.constant 0 : index
    %1 = vector.load %arg3[%c0_2, %c0_3] : memref<8x128xf32, #tpu.memory_space<vmem>>, vector<8x128xf32>
    %2 = vector.shape_cast %1 : vector<8x128xf32> to vector<1x8x128xf32>
    %3 = vector.broadcast %2 : vector<1x8x128xf32> to vector<2x8x128xf32>
    %4 = arith.addf %0, %3 : vector<2x8x128xf32>
    %c0_4 = arith.constant 0 : index
    %c0_5 = arith.constant 0 : index
    %c0_6 = arith.constant 0 : index
    %5 = vector.load %arg4[%c0_4, %c0_5, %c0_6] : memref<2x8x128xf32, #tpu.memory_space<vmem>>, vector<2x8x128xf32>
    tpu.vector_store %arg4[%c0_4, %c0_5, %c0_6], %4 {strides = array<i32>} : memref<2x8x128xf32, #tpu.memory_space<vmem>>, vector<2x8x128xf32>,
    return
  }
  func.func @transform_0(%arg0: i32, %arg1: i32) -> (i32, i32, i32) {
    %c0_i32 = arith.constant 0 : i32
    %c0_i32_0 = arith.constant 0 : i32
    return %arg1, %arg0, %c0_i32 : i32, i32, i32
  }
  func.func @transform_1(%arg0: i32, %arg1: i32) -> (i32, i32) {
    %c0_i32 = arith.constant 0 : i32
    %c0_i32_0 = arith.constant 0 : i32
    return %arg0, %c0_i32 : i32, i32
  }
  func.func @transform_2(%arg0: i32, %arg1: i32) -> (i32, i32, i32) {
    %c0_i32 = arith.constant 0 : i32
    %c0_i32_0 = arith.constant 0 : i32
    return %arg1, %arg0, %c0_i32 : i32, i32, i32
  }
}

</mosaic_0001>

<llo_original>
// kernel: tpu_custom_call.1
$region0: #{tpu_custom_call.1}
  #allocation0 [shape = 'u32[]', space=smem, size = 0x4, offset = 0x4, fixed_abs, tag = 'smem constant byte address 0x4 - core index']
  #allocation1 [shape = 'u32[144,128]{1,0:T(1,128)}', space=vmem, size = 0x12000, scoped, tag = 'internal scratch']
  %s0 = inlined_call_operand.hbm [shape: f32[2,8,128], index: 0, kind: input, shape index: {}]
  %s1 = inlined_call_operand.hbm [shape: f32[8,128], index: 1, kind: input, shape index: {}]
  %s2 = inlined_call_operand.hbm [shape: f32[2,8,128], index: 2, kind: output, shape index: {}]
  %s3 = sld [smem:[#allocation0]]
  $region26: #{tpu_custom_call.1} parent=0
    _
  %s5 = ssub.s32 1, %s3
  %s6 = scalar_select 0, %s5, %s3
  $region1: #{tpu_custom_call.1} parent=0
    #allocation2 [shape = 'u8[8192]{0}', space=vmem, size = 0x2000, scoped, tag = 'input window, operand 0, single buffered']
    #allocation3 [shape = 's32[1]{0}', space=sflag, size = 0x4, scoped, tag = 'scoped memory for tpu_custom_call.1']
    #allocation4 [shape = 's32[1]{0}', space=sflag, size = 0x4, scoped, tag = 'scoped memory for tpu_custom_call.1']
    #allocation5 [shape = 'u8[4096]{0}', space=vmem, size = 0x1000, scoped, tag = 'input window, operand 1, single buffered']
    #allocation6 [shape = 's32[1]{0}', space=sflag, size = 0x4, scoped, tag = 'scoped memory for tpu_custom_call.1']
    #allocation7 [shape = 'u8[8192]{0}', space=vmem, size = 0x2000, scoped, tag = 'output window, operand 0, single buffered']
    %7 = vsyncpa [#allocation3], 0
    %8 = vsyncpa [#allocation6], 0
    %9 = vsyncpa [#allocation4], 0
    // Predicated region
    $region2: #{tpu_custom_call.1} parent=1 // pred_check
      _
    $region3: #{tpu_custom_call.1} parent=1 // pred_check_branch
      %11 = sbr.rel (0) target = $region5
    $region4: #{tpu_custom_call.1} parent=1 // pred_region
      %s13 = ssub.s32 256, 256
      %14 = vsyncadd [#allocation3], %s13
      %s15 = sshll.u32 [#allocation2], 4
      %s16 = int_to_ptr.vmem [resolvable:$true] %s15
      %21 = dma.hbm_to_vmem [thread:$0]  %s0, 256, %s16, [#allocation3], 128, 128, 8
    $region5: #{tpu_custom_call.1} parent=1 // pred_fallthru
      _
    // Predicated region
    $region6: #{tpu_custom_call.1} parent=1 // pred_check
      _
    $region7: #{tpu_custom_call.1} parent=1 // pred_check_branch
      %23 = sbr.rel (0) target = $region9
    $region8: #{tpu_custom_call.1} parent=1 // pred_region
      %s25 = ssub.s32 128, 128
      %26 = vsyncadd [#allocation6], %s25
      %s28 = sshll.u32 [#allocation5], 4
      %s29 = int_to_ptr.vmem [resolvable:$true] %s28
      %31 = dma.hbm_to_vmem [thread:$0]  %s1, 128, %s29, [#allocation6]
    $region9: #{tpu_custom_call.1} parent=1 // pred_fallthru
      _
    // Predicated region
    $region10: #{tpu_custom_call.1} parent=1 // pred_check
      _
    $region11: #{tpu_custom_call.1} parent=1 // pred_check_branch
      %33 = sbr.rel (0) target = $region13
    $region12: #{tpu_custom_call.1} parent=1 // pred_region
      %34 = dma.done [#allocation3], 256
    $region13: #{tpu_custom_call.1} parent=1 // pred_fallthru
      _
    // Predicated region
    $region14: #{tpu_custom_call.1} parent=1 // pred_check
      _
    $region15: #{tpu_custom_call.1} parent=1 // pred_check_branch
      %36 = sbr.rel (0) target = $region17
    $region16: #{tpu_custom_call.1} parent=1 // pred_region
      %37 = dma.done [#allocation6], 128
    $region17: #{tpu_custom_call.1} parent=1 // pred_fallthru
      _
    %v38 = vld [vmem:[#allocation2] sm:$0xff]
    %v39 = vld [vmem:[#allocation2 + $0x8] sm:$0xff]
    %v40 = vld [vmem:[#allocation5] sm:$0xff]
    %v41 = vadd.f32 %v38, %v40
    %v42 = vadd.f32 %v39, %v40
    %43 = vst [vmem:[#allocation7] sm:$0xff] %v41
    %44 = vst [vmem:[#allocation7 + $0x8] sm:$0xff] %v42
    // Predicated region
    $region18: #{tpu_custom_call.1} parent=1 // pred_check
      _
    $region19: #{tpu_custom_call.1} parent=1 // pred_check_branch
      %46 = sbr.rel (0) target = $region21
    $region20: #{tpu_custom_call.1} parent=1 // pred_region
      %s48 = ssub.s32 256, 256
      %49 = vsyncadd [#allocation4], %s48
      %s50 = sshll.u32 [#allocation7], 4
      %s51 = int_to_ptr.vmem [resolvable:$true] %s50
      %56 = dma.vmem_to_hbm [thread:$0]  %s51, 256, %s2, [#allocation4], 128, 128, 8
    $region21: #{tpu_custom_call.1} parent=1 // pred_fallthru
      _
    // Predicated region
    $region22: #{tpu_custom_call.1} parent=1 // pred_check
      _
    $region23: #{tpu_custom_call.1} parent=1 // pred_check_branch
      %58 = sbr.rel (0) target = $region25
    $region24: #{tpu_custom_call.1} parent=1 // pred_region
      %59 = dma.done [#allocation4], 256
    $region25: #{tpu_custom_call.1} parent=1 // pred_fallthru
      _
    %60 = vsyncpa [#allocation3], 1
    %61 = vsyncpa [#allocation6], 1
    %62 = vsyncpa [#allocation4], 1

</llo_original>
